<compile_context>
chip_gen: v7x
topology: tpu7x:2x2x1
jax: 0.10.0
libtpu: 0.0.40
codegen_flags: <defaults>
</compile_context>

<pallas_src>
import functools

import jax
import jax.numpy as jnp
from jax.experimental import pallas as pl
from jax.experimental.pallas import tpu as pltpu

_C1 = 0.01 ** 2
_C2 = 0.03 ** 2


# ---------------------------------------------------------------------------
# Fused SSIM kernel on a (tn, H, W*C) block (NHWC with W,C merged on lanes).
# ---------------------------------------------------------------------------
def _ssim_kernel(x_ref, y_ref, m_ref, o_ref, *, h, wc, c, ho, woc, c1, c2):
    x = x_ref[...].astype(jnp.float32)
    y = y_ref[...].astype(jnp.float32)
    m = m_ref[...].astype(jnp.float32)

    def box_sum(a):
        # Centered 3x3 box sum computed at full (H, W*C) width.  The window
        # along W becomes lane shifts of stride C in the merged W*C axis and
        # the window along H is a sublane shift.  Using both rotation
        # directions (positive shifts k and size-k) keeps the math on the XLU
        # slot and makes it independent of the rotate convention; the valid
        # window for output (i, j) sits at (i + 1, j + C) and is cropped only
        # once at the final store.
        hs = a + pltpu.roll(a, c, axis=2) + pltpu.roll(a, wc - c, axis=2)
        vs = hs + pltpu.roll(hs, 1, axis=1) + pltpu.roll(hs, h - 1, axis=1)
        return vs

    inv9 = 1.0 / 9.0
    mu_x = box_sum(x) * inv9
    mu_y = box_sum(y) * inv9
    sigma_x = box_sum(x * x) * inv9 - mu_x * mu_x
    sigma_y = box_sum(y * y) * inv9 - mu_y * mu_y
    sigma_xy = box_sum(x * y) * inv9 - mu_x * mu_y
    ssim_mask = box_sum(m) * inv9

    ssim_n = (2.0 * mu_x * mu_y + c1) * (2.0 * sigma_xy + c2)
    ssim_d = (mu_x * mu_x + mu_y * mu_y + c1) * (sigma_x + sigma_y + c2)

    # EUP approx reciprocal + one Newton step (denominator is strictly > 0).
    r = pl.reciprocal(ssim_d, approx=True)
    r = r * (2.0 - ssim_d * r)

    val = jnp.clip((1.0 - ssim_n * r) * 0.5, 0.0, 1.0)
    out = ssim_mask * val

    # Single crop of the final value (centered-window offset) at the store.
    o_ref[...] = out[:, 1:1 + ho, c:c + woc].astype(o_ref.dtype)


# ---------------------------------------------------------------------------
# Tiling / VMEM budgeting.
# ---------------------------------------------------------------------------
def _vmem_limit_bytes():
    # Explicit, generation-aware scoped-VMEM limit instead of the default.
    try:
        cap = int(pltpu.get_tpu_info().vmem_capacity_bytes)
    except Exception:
        cap = 64 * 1024 * 1024
    return int(min(cap // 2, 64 * 1024 * 1024))


def _block_bytes(tn, h, wc, ho, woc, in_itemsize):
    in_tile = tn * h * wc
    out_tile = tn * ho * woc
    # Double-buffered pipeline tiles (3 inputs + 1 output) ...
    pipelined = 3 * 2 * in_tile * in_itemsize + 2 * out_tile * 4
    # ... plus ~8 live full-size f32 temporaries inside the kernel body
    # (f32 casts, products, box sums, mu/sigma terms).
    temps = 8 * in_tile * 4
    return pipelined + temps


def _pick_batch_tile(n, h, wc, ho, woc, in_itemsize, vmem_limit):
    # Largest divisor of N whose working set fits the VMEM budget, capped so
    # the grid has >= 2 steps (v7x megacore gets both TensorCores busy).
    cap = n if n < 2 else n // 2
    tn = 1
    for d in range(1, n + 1):
        if (n % d == 0 and d <= cap
                and _block_bytes(d, h, wc, ho, woc, in_itemsize) <= vmem_limit):
            tn = d
    return tn


# ---------------------------------------------------------------------------
# Wrapper: NHWC in, (N, H-2, W-2, C) out — only free reshapes outside kernel.
# ---------------------------------------------------------------------------
@jax.jit
def ssim_forward(x_nhwc, y_nhwc, mask_nhwc):
    n, h, w, c = x_nhwc.shape
    ho, wo = h - 2, w - 2
    wc, woc = w * c, wo * c

    # Merge W and C onto the lane axis: layout-preserving (free) reshape.
    xp = x_nhwc.reshape(n, h, wc)
    yp = y_nhwc.reshape(n, h, wc)
    mp = mask_nhwc.reshape(n, h, wc)

    vmem_limit = _vmem_limit_bytes()
    in_itemsize = max(x_nhwc.dtype.itemsize, y_nhwc.dtype.itemsize,
                      mask_nhwc.dtype.itemsize)
    tn = _pick_batch_tile(n, h, wc, ho, woc, in_itemsize, vmem_limit)

    kernel = functools.partial(_ssim_kernel, h=h, wc=wc, c=c, ho=ho, woc=woc,
                               c1=_C1, c2=_C2)
    in_spec = pl.BlockSpec((tn, h, wc), lambda i: (i, 0, 0))
    out_spec = pl.BlockSpec((tn, ho, woc), lambda i: (i, 0, 0))

    out = pl.pallas_call(
        kernel,
        out_shape=jax.ShapeDtypeStruct((n, ho, woc), jnp.float32),
        grid=(n // tn,),
        in_specs=[in_spec, in_spec, in_spec],
        out_specs=out_spec,
        compiler_params=pltpu.CompilerParams(
            dimension_semantics=("parallel",),
            vmem_limit_bytes=vmem_limit),
    )(xp, yp, mp)

    # Free reshape back to (N, H-2, W-2, C) — already NHWC ordered.
    return out.reshape(n, ho, wo, c)


# ---------------------------------------------------------------------------
# Pure-JAX reference (matches the PyTorch module) for correctness checking.
# ---------------------------------------------------------------------------
def _reference(x, y, mask, c1=_C1, c2=_C2):
    def pool(a):
        s = jax.lax.reduce_window(a, 0.0, jax.lax.add,
                                  (1, 1, 3, 3), (1, 1, 1, 1), "VALID")
        return s / 9.0

    xt = jnp.transpose(x, (0, 3, 1, 2)).astype(jnp.float32)
    yt = jnp.transpose(y, (0, 3, 1, 2)).astype(jnp.float32)
    mt = jnp.transpose(mask, (0, 3, 1, 2)).astype(jnp.float32)

    mu_x = pool(xt)
    mu_y = pool(yt)
    sigma_x = pool(xt * xt) - mu_x ** 2
    sigma_y = pool(yt * yt) - mu_y ** 2
    sigma_xy = pool(xt * yt) - mu_x * mu_y

    ssim_n = (2 * mu_x * mu_y + c1) * (2 * sigma_xy + c2)
    ssim_d = (mu_x ** 2 + mu_y ** 2 + c1) * (sigma_x + sigma_y + c2)
    ssim_mask = pool(mt)

    out = ssim_mask * jnp.clip((1 - ssim_n / ssim_d) / 2, 0.0, 1.0)
    return jnp.transpose(out, (0, 2, 3, 1))


if __name__ == "__main__":
    key = jax.random.PRNGKey(0)
    kx, ky, km = jax.random.split(key, 3)

    N, H, W, C = 2, 16, 16, 8   # W*C = 128 -> lane-dense merged layout
    x = jax.random.uniform(kx, (N, H, W, C), dtype=jnp.float32)
    y = jax.random.uniform(ky, (N, H, W, C), dtype=jnp.float32)
    mask = (jax.random.uniform(km, (N, H, W, C)) > 0.3).astype(jnp.float32)

    out = jax.block_until_ready(ssim_forward(x, y, mask))
    ref = _reference(x, y, mask)

    assert out.shape == (N, H - 2, W - 2, C)
    err = float(jnp.max(jnp.abs(out - ref)))
    assert jnp.allclose(out, ref, atol=1e-4, rtol=1e-4), f"mismatch: {err}"

    print("KERNEL_OK")
</pallas_src>

<mosaic_0001>
module attributes {stable_mosaic.version = 11 : i64} {
  func.func @_ssim_kernel(%arg0: i32, %arg1: memref<1x16x128xf32, #tpu.memory_space<vmem>>, %arg2: memref<1x16x128xf32, #tpu.memory_space<vmem>>, %arg3: memref<1x16x128xf32, #tpu.memory_space<vmem>>, %arg4: memref<1x14x112xf32, #tpu.memory_space<vmem>>) attributes {dimension_semantics = [#tpu.dimension_semantics<parallel>], iteration_bounds = array<i64: 2>, scalar_prefetch = 0 : i64, scratch_operands = 0 : i64, tpu.core_type = #tpu.core_type<tc>, window_params = [{transform_indices = @transform_0, window_bounds = array<i64: 1, 16, 128>}, {transform_indices = @transform_1, window_bounds = array<i64: 1, 16, 128>}, {transform_indices = @transform_2, window_bounds = array<i64: 1, 16, 128>}, {transform_indices = @transform_3, window_bounds = array<i64: 1, 14, 112>}]} {
    %c0 = arith.constant 0 : index
    %c0_0 = arith.constant 0 : index
    %c0_1 = arith.constant 0 : index
    %0 = vector.load %arg1[%c0, %c0_0, %c0_1] : memref<1x16x128xf32, #tpu.memory_space<vmem>>, vector<1x16x128xf32>
    %c0_2 = arith.constant 0 : index
    %c0_3 = arith.constant 0 : index
    %c0_4 = arith.constant 0 : index
    %1 = vector.load %arg2[%c0_2, %c0_3, %c0_4] : memref<1x16x128xf32, #tpu.memory_space<vmem>>, vector<1x16x128xf32>
    %c0_5 = arith.constant 0 : index
    %c0_6 = arith.constant 0 : index
    %c0_7 = arith.constant 0 : index
    %2 = vector.load %arg3[%c0_5, %c0_6, %c0_7] : memref<1x16x128xf32, #tpu.memory_space<vmem>>, vector<1x16x128xf32>
    %c8_i32 = arith.constant 8 : i32
    %3 = tpu.dynamic_rotate %0 by %c8_i32 dim 2 : vector<1x16x128xf32>, i32 -> vector<1x16x128xf32>
    %4 = arith.addf %0, %3 : vector<1x16x128xf32>
    %c120_i32 = arith.constant 120 : i32
    %5 = tpu.dynamic_rotate %0 by %c120_i32 dim 2 : vector<1x16x128xf32>, i32 -> vector<1x16x128xf32>
    %6 = arith.addf %4, %5 : vector<1x16x128xf32>
    %c1_i32 = arith.constant 1 : i32
    %7 = tpu.dynamic_rotate %6 by %c1_i32 dim 1 : vector<1x16x128xf32>, i32 -> vector<1x16x128xf32>
    %8 = arith.addf %6, %7 : vector<1x16x128xf32>
    %c15_i32 = arith.constant 15 : i32
    %9 = tpu.dynamic_rotate %6 by %c15_i32 dim 1 : vector<1x16x128xf32>, i32 -> vector<1x16x128xf32>
    %10 = arith.addf %8, %9 : vector<1x16x128xf32>
    %cst = arith.constant 0.111111112 : f32
    %11 = vector.broadcast %cst : f32 to vector<1x16x128xf32>
    %12 = arith.mulf %10, %11 : vector<1x16x128xf32>
    %c8_i32_8 = arith.constant 8 : i32
    %13 = tpu.dynamic_rotate %1 by %c8_i32_8 dim 2 : vector<1x16x128xf32>, i32 -> vector<1x16x128xf32>
    %14 = arith.addf %1, %13 : vector<1x16x128xf32>
    %c120_i32_9 = arith.constant 120 : i32
    %15 = tpu.dynamic_rotate %1 by %c120_i32_9 dim 2 : vector<1x16x128xf32>, i32 -> vector<1x16x128xf32>
    %16 = arith.addf %14, %15 : vector<1x16x128xf32>
    %c1_i32_10 = arith.constant 1 : i32
    %17 = tpu.dynamic_rotate %16 by %c1_i32_10 dim 1 : vector<1x16x128xf32>, i32 -> vector<1x16x128xf32>
    %18 = arith.addf %16, %17 : vector<1x16x128xf32>
    %c15_i32_11 = arith.constant 15 : i32
    %19 = tpu.dynamic_rotate %16 by %c15_i32_11 dim 1 : vector<1x16x128xf32>, i32 -> vector<1x16x128xf32>
    %20 = arith.addf %18, %19 : vector<1x16x128xf32>
    %cst_12 = arith.constant 0.111111112 : f32
    %21 = vector.broadcast %cst_12 : f32 to vector<1x16x128xf32>
    %22 = arith.mulf %20, %21 : vector<1x16x128xf32>
    %23 = arith.mulf %0, %0 : vector<1x16x128xf32>
    %c8_i32_13 = arith.constant 8 : i32
    %24 = tpu.dynamic_rotate %23 by %c8_i32_13 dim 2 : vector<1x16x128xf32>, i32 -> vector<1x16x128xf32>
    %25 = arith.addf %23, %24 : vector<1x16x128xf32>
    %c120_i32_14 = arith.constant 120 : i32
    %26 = tpu.dynamic_rotate %23 by %c120_i32_14 dim 2 : vector<1x16x128xf32>, i32 -> vector<1x16x128xf32>
    %27 = arith.addf %25, %26 : vector<1x16x128xf32>
    %c1_i32_15 = arith.constant 1 : i32
    %28 = tpu.dynamic_rotate %27 by %c1_i32_15 dim 1 : vector<1x16x128xf32>, i32 -> vector<1x16x128xf32>
    %29 = arith.addf %27, %28 : vector<1x16x128xf32>
    %c15_i32_16 = arith.constant 15 : i32
    %30 = tpu.dynamic_rotate %27 by %c15_i32_16 dim 1 : vector<1x16x128xf32>, i32 -> vector<1x16x128xf32>
    %31 = arith.addf %29, %30 : vector<1x16x128xf32>
    %cst_17 = arith.constant 0.111111112 : f32
    %32 = vector.broadcast %cst_17 : f32 to vector<1x16x128xf32>
    %33 = arith.mulf %31, %32 : vector<1x16x128xf32>
    %34 = arith.mulf %12, %12 : vector<1x16x128xf32>
    %35 = arith.subf %33, %34 : vector<1x16x128xf32>
    %36 = arith.mulf %1, %1 : vector<1x16x128xf32>
    %c8_i32_18 = arith.constant 8 : i32
    %37 = tpu.dynamic_rotate %36 by %c8_i32_18 dim 2 : vector<1x16x128xf32>, i32 -> vector<1x16x128xf32>
    %38 = arith.addf %36, %37 : vector<1x16x128xf32>
    %c120_i32_19 = arith.constant 120 : i32
    %39 = tpu.dynamic_rotate %36 by %c120_i32_19 dim 2 : vector<1x16x128xf32>, i32 -> vector<1x16x128xf32>
    %40 = arith.addf %38, %39 : vector<1x16x128xf32>
    %c1_i32_20 = arith.constant 1 : i32
    %41 = tpu.dynamic_rotate %40 by %c1_i32_20 dim 1 : vector<1x16x128xf32>, i32 -> vector<1x16x128xf32>
    %42 = arith.addf %40, %41 : vector<1x16x128xf32>
    %c15_i32_21 = arith.constant 15 : i32
    %43 = tpu.dynamic_rotate %40 by %c15_i32_21 dim 1 : vector<1x16x128xf32>, i32 -> vector<1x16x128xf32>
    %44 = arith.addf %42, %43 : vector<1x16x128xf32>
    %cst_22 = arith.constant 0.111111112 : f32
    %45 = vector.broadcast %cst_22 : f32 to vector<1x16x128xf32>
    %46 = arith.mulf %44, %45 : vector<1x16x128xf32>
    %47 = arith.mulf %22, %22 : vector<1x16x128xf32>
    %48 = arith.subf %46, %47 : vector<1x16x128xf32>
    %49 = arith.mulf %0, %1 : vector<1x16x128xf32>
    %c8_i32_23 = arith.constant 8 : i32
    %50 = tpu.dynamic_rotate %49 by %c8_i32_23 dim 2 : vector<1x16x128xf32>, i32 -> vector<1x16x128xf32>
    %51 = arith.addf %49, %50 : vector<1x16x128xf32>
    %c120_i32_24 = arith.constant 120 : i32
    %52 = tpu.dynamic_rotate %49 by %c120_i32_24 dim 2 : vector<1x16x128xf32>, i32 -> vector<1x16x128xf32>
    %53 = arith.addf %51, %52 : vector<1x16x128xf32>
    %c1_i32_25 = arith.constant 1 : i32
    %54 = tpu.dynamic_rotate %53 by %c1_i32_25 dim 1 : vector<1x16x128xf32>, i32 -> vector<1x16x128xf32>
    %55 = arith.addf %53, %54 : vector<1x16x128xf32>
    %c15_i32_26 = arith.constant 15 : i32
    %56 = tpu.dynamic_rotate %53 by %c15_i32_26 dim 1 : vector<1x16x128xf32>, i32 -> vector<1x16x128xf32>
    %57 = arith.addf %55, %56 : vector<1x16x128xf32>
    %cst_27 = arith.constant 0.111111112 : f32
    %58 = vector.broadcast %cst_27 : f32 to vector<1x16x128xf32>
    %59 = arith.mulf %57, %58 : vector<1x16x128xf32>
    %60 = arith.mulf %12, %22 : vector<1x16x128xf32>
    %61 = arith.subf %59, %60 : vector<1x16x128xf32>
    %c8_i32_28 = arith.constant 8 : i32
    %62 = tpu.dynamic_rotate %2 by %c8_i32_28 dim 2 : vector<1x16x128xf32>, i32 -> vector<1x16x128xf32>
    %63 = arith.addf %2, %62 : vector<1x16x128xf32>
    %c120_i32_29 = arith.constant 120 : i32
    %64 = tpu.dynamic_rotate %2 by %c120_i32_29 dim 2 : vector<1x16x128xf32>, i32 -> vector<1x16x128xf32>
    %65 = arith.addf %63, %64 : vector<1x16x128xf32>
    %c1_i32_30 = arith.constant 1 : i32
    %66 = tpu.dynamic_rotate %65 by %c1_i32_30 dim 1 : vector<1x16x128xf32>, i32 -> vector<1x16x128xf32>
    %67 = arith.addf %65, %66 : vector<1x16x128xf32>
    %c15_i32_31 = arith.constant 15 : i32
    %68 = tpu.dynamic_rotate %65 by %c15_i32_31 dim 1 : vector<1x16x128xf32>, i32 -> vector<1x16x128xf32>
    %69 = arith.addf %67, %68 : vector<1x16x128xf32>
    %cst_32 = arith.constant 0.111111112 : f32
    %70 = vector.broadcast %cst_32 : f32 to vector<1x16x128xf32>
    %71 = arith.mulf %69, %70 : vector<1x16x128xf32>
    %cst_33 = arith.constant 2.000000e+00 : f32
    %72 = vector.broadcast %cst_33 : f32 to vector<1x16x128xf32>
    %73 = arith.mulf %72, %12 : vector<1x16x128xf32>
    %74 = arith.mulf %73, %22 : vector<1x16x128xf32>
    %cst_34 = arith.constant 9.99999974E-5 : f32
    %75 = vector.broadcast %cst_34 : f32 to vector<1x16x128xf32>
    %76 = arith.addf %74, %75 : vector<1x16x128xf32>
    %cst_35 = arith.constant 2.000000e+00 : f32
    %77 = vector.broadcast %cst_35 : f32 to vector<1x16x128xf32>
    %78 = arith.mulf %77, %61 : vector<1x16x128xf32>
    %cst_36 = arith.constant 8.99999984E-4 : f32
    %79 = vector.broadcast %cst_36 : f32 to vector<1x16x128xf32>
    %80 = arith.addf %78, %79 : vector<1x16x128xf32>
    %81 = arith.mulf %76, %80 : vector<1x16x128xf32>
    %82 = arith.mulf %12, %12 : vector<1x16x128xf32>
    %83 = arith.mulf %22, %22 : vector<1x16x128xf32>
    %84 = arith.addf %82, %83 : vector<1x16x128xf32>
    %cst_37 = arith.constant 9.99999974E-5 : f32
    %85 = vector.broadcast %cst_37 : f32 to vector<1x16x128xf32>
    %86 = arith.addf %84, %85 : vector<1x16x128xf32>
    %87 = arith.addf %35, %48 : vector<1x16x128xf32>
    %cst_38 = arith.constant 8.99999984E-4 : f32
    %88 = vector.broadcast %cst_38 : f32 to vector<1x16x128xf32>
    %89 = arith.addf %87, %88 : vector<1x16x128xf32>
    %90 = arith.mulf %86, %89 : vector<1x16x128xf32>
    %91 = tpu.reciprocal %90 {approx = true} : vector<1x16x128xf32> -> vector<1x16x128xf32>
    %92 = arith.mulf %90, %91 : vector<1x16x128xf32>
    %cst_39 = arith.constant 2.000000e+00 : f32
    %93 = vector.broadcast %cst_39 : f32 to vector<1x16x128xf32>
    %94 = arith.subf %93, %92 : vector<1x16x128xf32>
    %95 = arith.mulf %91, %94 : vector<1x16x128xf32>
    %96 = arith.mulf %81, %95 : vector<1x16x128xf32>
    %cst_40 = arith.constant 1.000000e+00 : f32
    %97 = vector.broadcast %cst_40 : f32 to vector<1x16x128xf32>
    %98 = arith.subf %97, %96 : vector<1x16x128xf32>
    %cst_41 = arith.constant 5.000000e-01 : f32
    %99 = vector.broadcast %cst_41 : f32 to vector<1x16x128xf32>
    %100 = arith.mulf %98, %99 : vector<1x16x128xf32>
    %cst_42 = arith.constant 0.000000e+00 : f32
    %cst_43 = arith.constant 1.000000e+00 : f32
    %101 = vector.broadcast %cst_42 : f32 to vector<1x16x128xf32>
    %102 = arith.maximumf %101, %100 : vector<1x16x128xf32>
    %103 = vector.broadcast %cst_43 : f32 to vector<1x16x128xf32>
    %104 = arith.minimumf %103, %102 : vector<1x16x128xf32>
    %105 = arith.mulf %71, %104 : vector<1x16x128xf32>
    %106 = vector.extract_strided_slice %105 {offsets = [0, 1, 8], sizes = [1, 14, 112], strides = [1, 1, 1]} : vector<1x16x128xf32> to vector<1x14x112xf32>
    %c0_44 = arith.constant 0 : index
    %c0_45 = arith.constant 0 : index
    %c0_46 = arith.constant 0 : index
    %107 = vector.load %arg4[%c0_44, %c0_45, %c0_46] : memref<1x14x112xf32, #tpu.memory_space<vmem>>, vector<1x14x112xf32>
    tpu.vector_store %arg4[%c0_44, %c0_45, %c0_46], %106 {strides = array<i32>} : memref<1x14x112xf32, #tpu.memory_space<vmem>>, vector<1x14x112xf32>,
    return
  }
  func.func @transform_0(%arg0: i32) -> (i32, i32, i32) {
    %c0_i32 = arith.constant 0 : i32
    %c0_i32_0 = arith.constant 0 : i32
    %c0_i32_1 = arith.constant 0 : i32
    return %arg0, %c0_i32, %c0_i32_0 : i32, i32, i32
  }
  func.func @transform_1(%arg0: i32) -> (i32, i32, i32) {
    %c0_i32 = arith.constant 0 : i32
    %c0_i32_0 = arith.constant 0 : i32
    %c0_i32_1 = arith.constant 0 : i32
    return %arg0, %c0_i32, %c0_i32_0 : i32, i32, i32
  }
  func.func @transform_2(%arg0: i32) -> (i32, i32, i32) {
    %c0_i32 = arith.constant 0 : i32
    %c0_i32_0 = arith.constant 0 : i32
    %c0_i32_1 = arith.constant 0 : i32
    return %arg0, %c0_i32, %c0_i32_0 : i32, i32, i32
  }
  func.func @transform_3(%arg0: i32) -> (i32, i32, i32) {
    %c0_i32 = arith.constant 0 : i32
    %c0_i32_0 = arith.constant 0 : i32
    %c0_i32_1 = arith.constant 0 : i32
    return %arg0, %c0_i32, %c0_i32_0 : i32, i32, i32
  }
}

</mosaic_0001>

<llo_original>
// kernel: ssim_forward.1
$region0: #{ssim_forward.1}
  #allocation0 [shape = 'u32[]', space=smem, size = 0x4, offset = 0x4, fixed_abs, tag = 'smem constant byte address 0x4 - core index']
  #allocation1 [shape = 'u32[144,128]{1,0:T(1,128)}', space=vmem, size = 0x12000, scoped, tag = 'internal scratch']
  %s0 = inlined_call_operand.vmem [shape: f32[2,16,128], index: 0, kind: input, shape index: {}]
  %s1 = inlined_call_operand.vmem [shape: f32[2,16,128], index: 1, kind: input, shape index: {}]
  %s2 = inlined_call_operand.vmem [shape: f32[2,16,128], index: 2, kind: input, shape index: {}]
  %s3 = inlined_call_operand.vmem [shape: f32[2,14,112], index: 3, kind: output, shape index: {}]
  %s4 = sld [smem:[#allocation0]]
  $region45: #{ssim_forward.1} parent=0
    _
  %s6 = ssub.s32 1, %s4
  %s7 = scalar_select 0, %s6, %s4
  loop: start=0, step=1, limit=4
  $region2: #{ssim_forward.1} parent=0 // loop_pre_header
    _
  $region3: #{ssim_forward.1} parent=0 // loop_header
    %s9 = sphi 0, %s13
    %p10 = scmp.ge.s32.totalorder %s9, 4
    %s19 = sphi 0, %s21
    %s22 = sphi 0, %s19
    %s23 = sphi 0, %s22
    %s39 = sphi 0, %s23
    %s45 = sphi 0, %s47
    %s48 = sphi 0, %s45
    %s49 = sphi 0, %s48
    %s65 = sphi 0, %s49
    %s71 = sphi 0, %s73
    %s74 = sphi 0, %s71
    %s75 = sphi 0, %s74
    %s91 = sphi 0, %s75
    %s97 = sphi 0, %s99
    %s100 = sphi 0, %s97
    %s101 = sphi 0, %s100
    %s117 = sphi 0, %s101
  $region4: #{ssim_forward.1} parent=0 // loop_header_branch
    %12 = sbr.rel (%p10) target = $region8
  $region5: #{ssim_forward.1} parent=0 // loop_body
    %s14 = ssub.s32 %s9, 1
    %s15 = ssub.s32 %s9, 2
    %s16 = sadd.s32 %s9, 1
    %s17 = ssub.s32 %s9, %s16
    %p18 = scmp.eq.s32.totalorder %s17, 0
    %s20 = sadd.s32 %s19, 1
    %s21 = scalar_select %p18, %s19, %s20
    %p24 = pneg %p18
    %p25 = scmp.eq.s32.totalorder %s9, 1
    %p26 = por %p24, %p25
    %p27 = scmp.ne.s32.totalorder %s19, %s22
    %p28 = scmp.eq.s32.totalorder %s9, 0
    %p29 = por %p27, %p28
    %p30 = scmp.ne.s32.totalorder %s19, %s22
    %p31 = scmp.eq.s32.totalorder %s14, 1
    %p32 = por %p30, %p31
    %p33 = scmp.ne.s32.totalorder %s22, %s23
    %p34 = scmp.eq.s32.totalorder %s14, 0
    %p35 = por %p33, %p34
    %p36 = scmp.ne.s32.totalorder %s22, %s23
    %p37 = scmp.eq.s32.totalorder %s15, 1
    %p38 = por %p36, %p37
    %p40 = scmp.ne.s32.totalorder %s23, %s39
    %p41 = scmp.eq.s32.totalorder %s15, 0
    %p42 = por %p40, %p41
    %s43 = ssub.s32 %s9, %s16
    %p44 = scmp.eq.s32.totalorder %s43, 0
    %s46 = sadd.s32 %s45, 1
    %s47 = scalar_select %p44, %s45, %s46
    %p50 = pneg %p44
    %p51 = scmp.eq.s32.totalorder %s9, 1
    %p52 = por %p50, %p51
    %p53 = scmp.ne.s32.totalorder %s45, %s48
    %p54 = scmp.eq.s32.totalorder %s9, 0
    %p55 = por %p53, %p54
    %p56 = scmp.ne.s32.totalorder %s45, %s48
    %p57 = scmp.eq.s32.totalorder %s14, 1
    %p58 = por %p56, %p57
    %p59 = scmp.ne.s32.totalorder %s48, %s49
    %p60 = scmp.eq.s32.totalorder %s14, 0
    %p61 = por %p59, %p60
    %p62 = scmp.ne.s32.totalorder %s48, %s49
    %p63 = scmp.eq.s32.totalorder %s15, 1
    %p64 = por %p62, %p63
    %p66 = scmp.ne.s32.totalorder %s49, %s65
    %p67 = scmp.eq.s32.totalorder %s15, 0
    %p68 = por %p66, %p67
    %s69 = ssub.s32 %s9, %s16
    %p70 = scmp.eq.s32.totalorder %s69, 0
    %s72 = sadd.s32 %s71, 1
    %s73 = scalar_select %p70, %s71, %s72
    %p76 = pneg %p70
    %p77 = scmp.eq.s32.totalorder %s9, 1
    %p78 = por %p76, %p77
    %p79 = scmp.ne.s32.totalorder %s71, %s74
    %p80 = scmp.eq.s32.totalorder %s9, 0
    %p81 = por %p79, %p80
    %p82 = scmp.ne.s32.totalorder %s71, %s74
    %p83 = scmp.eq.s32.totalorder %s14, 1
    %p84 = por %p82, %p83
    %p85 = scmp.ne.s32.totalorder %s74, %s75
    %p86 = scmp.eq.s32.totalorder %s14, 0
    %p87 = por %p85, %p86
    %p88 = scmp.ne.s32.totalorder %s74, %s75
    %p89 = scmp.eq.s32.totalorder %s15, 1
    %p90 = por %p88, %p89
    %p92 = scmp.ne.s32.totalorder %s75, %s91
    %p93 = scmp.eq.s32.totalorder %s15, 0
    %p94 = por %p92, %p93
    %s95 = ssub.s32 %s9, %s16
    %p96 = scmp.eq.s32.totalorder %s95, 0
    %s98 = sadd.s32 %s97, 1
    %s99 = scalar_select %p96, %s97, %s98
    %p102 = pneg %p96
    %p103 = scmp.eq.s32.totalorder %s9, 1
    %p104 = por %p102, %p103
    %p105 = scmp.ne.s32.totalorder %s97, %s100
    %p106 = scmp.eq.s32.totalorder %s9, 0
    %p107 = por %p105, %p106
    %p108 = scmp.ne.s32.totalorder %s97, %s100
    %p109 = scmp.eq.s32.totalorder %s14, 1
    %p110 = por %p108, %p109
    %p111 = scmp.ne.s32.totalorder %s100, %s101
    %p112 = scmp.eq.s32.totalorder %s14, 0
    %p113 = por %p111, %p112
    %p114 = scmp.ne.s32.totalorder %s100, %s101
    %p115 = scmp.eq.s32.totalorder %s15, 1
    %p116 = por %p114, %p115
    %p118 = scmp.ne.s32.totalorder %s101, %s117
    %p119 = scmp.eq.s32.totalorder %s15, 0
    %p120 = por %p118, %p119
    %p121 = scmp.le.s32.totalorder 1, %s9
    %p122 = scmp.lt.s32.totalorder %s9, 3
    %p123 = pnand %p121, %p122
    %p124 = pneg %p123
    // Predicated region
    $region9: #{ssim_forward.1} parent=5 // pred_check
      _
    $region10: #{ssim_forward.1} parent=5 // pred_check_branch
      %126 = sbr.rel (%p123) target = $region12
    $region11: #{ssim_forward.1} parent=5 // pred_region
      %s127 = ssub.s32 %s9, 1
    $region12: #{ssim_forward.1} parent=5 // pred_fallthru
      _
    %p128 = scmp.lt.s32.totalorder %s9, 2
    // Predicated region
    $region13: #{ssim_forward.1} parent=5 // pred_check
      %p129 = pneg %p128
    $region14: #{ssim_forward.1} parent=5 // pred_check_branch
      %131 = sbr.rel (%p129) target = $region16
    $region15: #{ssim_forward.1} parent=5 // pred_region
      // Predicated region
      $region17: #{ssim_forward.1} parent=15 // pred_check
        %p132 = pneg %p29
      $region18: #{ssim_forward.1} parent=15 // pred_check_branch
        %134 = sbr.rel (%p132) target = $region20
      $region19: #{ssim_forward.1} parent=15 // pred_region
        %p135 = scmp.lt.s32.totalorder %s9, 1
        %s136 = scalar_select %p135, %s9, 1
        %s137 = smul.addr %s136, 2
        %s138 = smul.addr %s137, 8
        %s139 = scalar_lea.vmem %s0, %s138
      $region20: #{ssim_forward.1} parent=15 // pred_fallthru
        _
      // Predicated region
      $region21: #{ssim_forward.1} parent=15 // pred_check
        %p140 = pneg %p55
      $region22: #{ssim_forward.1} parent=15 // pred_check_branch
        %142 = sbr.rel (%p140) target = $region24
      $region23: #{ssim_forward.1} parent=15 // pred_region
        %p143 = scmp.lt.s32.totalorder %s9, 1
        %s144 = scalar_select %p143, %s9, 1
        %s145 = smul.addr %s144, 2
        %s146 = smul.addr %s145, 8
        %s147 = scalar_lea.vmem %s1, %s146
      $region24: #{ssim_forward.1} parent=15 // pred_fallthru
        _
      // Predicated region
      $region25: #{ssim_forward.1} parent=15 // pred_check
        %p148 = pneg %p81
      $region26: #{ssim_forward.1} parent=15 // pred_check_branch
        %150 = sbr.rel (%p148) target = $region28
      $region27: #{ssim_forward.1} parent=15 // pred_region
        %p151 = scmp.lt.s32.totalorder %s9, 1
        %s152 = scalar_select %p151, %s9, 1
        %s153 = smul.addr %s152, 2
        %s154 = smul.addr %s153, 8
        %s155 = scalar_lea.vmem %s2, %s154
      $region28: #{ssim_forward.1} parent=15 // pred_fallthru
        _
    $region16: #{ssim_forward.1} parent=5 // pred_fallthru
      _
    %p156 = scmp.le.s32.totalorder 1, %s9
    %p157 = scmp.lt.s32.totalorder %s9, 3
    %p158 = pnand %p156, %p157
    %p159 = pneg %p158
    // Predicated region
    $region29: #{ssim_forward.1} parent=5 // pred_check
      _
    $region30: #{ssim_forward.1} parent=5 // pred_check_branch
      %161 = sbr.rel (%p158) target = $region32
    $region31: #{ssim_forward.1} parent=5 // pred_region
      %s162 = ssub.s32 %s9, 1
      %p163 = scmp.lt.s32.totalorder %s14, 1
      %s164 = scalar_select %p163, %s14, 1
      %s165 = smul.addr %s164, 2
      %s166 = smul.addr %s165, 8
      %s167 = scalar_lea.vmem %s0, %s166
      %p168 = pneg %p35
      %p169 = pneg %p32
      %p170 = scmp.lt.s32.totalorder %s14, 1
      %s171 = scalar_select %p170, %s14, 1
      %s172 = smul.addr %s171, 2
      %s173 = smul.addr %s172, 8
      %s174 = scalar_lea.vmem %s1, %s173
      %p175 = pneg %p61
      %p176 = pneg %p58
      %p177 = scmp.lt.s32.totalorder %s14, 1
      %s178 = scalar_select %p177, %s14, 1
      %s179 = smul.addr %s178, 2
      %s180 = smul.addr %s179, 8
      %s181 = scalar_lea.vmem %s2, %s180
      %p182 = pneg %p87
      %p183 = pneg %p84
      %p184 = pneg %p113
      %p185 = pneg %p110
      %p186 = scmp.lt.s32.totalorder %s14, 1
      %s187 = scalar_select %p186, %s14, 1
      %s188 = smul.addr %s187, 2
      %s189 = smul.addr %s188, 8
      %s190 = scalar_lea.vmem %s3, %s189
      %p191 = scmp.lt.s32.totalorder %s14, 1
      %s192 = scalar_select %p191, %s14, 1
      %s193 = smul.addr %s192, 2
      %s194 = smul.addr %s193, 8
      %s195 = scalar_lea.vmem %s0, %s194
      %p196 = scmp.lt.s32.totalorder %s14, 1
      %s197 = scalar_select %p196, %s14, 1
      %s198 = smul.addr %s197, 2
      %s199 = smul.addr %s198, 8
      %s200 = scalar_lea.vmem %s1, %s199
      %p201 = scmp.lt.s32.totalorder %s14, 1
      %s202 = scalar_select %p201, %s14, 1
      %s203 = smul.addr %s202, 2
      %s204 = smul.addr %s203, 8
      %s205 = scalar_lea.vmem %s2, %s204
      %p206 = scmp.lt.s32.totalorder %s14, 1
      %s207 = scalar_select %p206, %s14, 1
      %s208 = smul.addr %s207, 2
      %s209 = smul.addr %s208, 8
      %s210 = scalar_lea.vmem %s3, %s209
      %v211 = vld [vmem:[%s195] sm:$0xff]
      %v212 = vld [vmem:[%s195 + $0x8] sm:$0xff]
      %v213 = vld [vmem:[%s200] sm:$0xff]
      %v214 = vld [vmem:[%s200 + $0x8] sm:$0xff]
      %v215 = vld [vmem:[%s205] sm:$0xff]
      %v216 = vld [vmem:[%s205 + $0x8] sm:$0xff]
      %217 = vrot.lane.b32.xlu0 %v211, 8
      %v218 = vpop.permute.xlu0 %217
      %219 = vrot.lane.b32.xlu0 %v212, 8
      %v220 = vpop.permute.xlu0 %219
      %v221 = vadd.f32 %v211, %v218
      %v222 = vadd.f32 %v212, %v220
      %223 = vrot.lane.b32.xlu0 %v211, 120
      %v224 = vpop.permute.xlu0 %223
      %225 = vrot.lane.b32.xlu0 %v212, 120
      %v226 = vpop.permute.xlu0 %225
      %v227 = vadd.f32 %v221, %v224
      %v228 = vadd.f32 %v222, %v226
      %v229 = vrot.slane %v227, 7
      %v230 = vrot.slane %v228, 7
      %v231 = vlaneseq
      %v232 = vshrl.u32 %v231, 7
      %vm233 = vcmp.lt.s32.totalorder %v232, 1
      %v234 = vsel %vm233, %v229, %v230
      %v235 = vsel %vm233, %v230, %v229
      %v236 = vadd.f32 %v227, %v235
      %v237 = vadd.f32 %v228, %v234
      %v238 = vrot.slane %v227, 1
      %v239 = vrot.slane %v228, 1
      %vm240 = vcmp.lt.s32.totalorder %v232, 7
      %v241 = vsel %vm240, %v238, %v239
      %v242 = vsel %vm240, %v239, %v238
      %v243 = vadd.f32 %v236, %v241
      %v244 = vadd.f32 %v237, %v242
      %v245 = vmul.f32 %v243, 0.11111111
      %v246 = vmul.f32 %v244, 0.11111111
      %247 = vrot.lane.b32.xlu0 %v213, 8
      %v248 = vpop.permute.xlu0 %247
      %249 = vrot.lane.b32.xlu0 %v214, 8
      %v250 = vpop.permute.xlu0 %249
      %v251 = vadd.f32 %v213, %v248
      %v252 = vadd.f32 %v214, %v250
      %253 = vrot.lane.b32.xlu0 %v213, 120
      %v254 = vpop.permute.xlu0 %253
      %255 = vrot.lane.b32.xlu0 %v214, 120
      %v256 = vpop.permute.xlu0 %255
      %v257 = vadd.f32 %v251, %v254
      %v258 = vadd.f32 %v252, %v256
      %v259 = vrot.slane %v257, 7
      %v260 = vrot.slane %v258, 7
      %v261 = vsel %vm233, %v259, %v260
      %v262 = vsel %vm233, %v260, %v259
      %v263 = vadd.f32 %v257, %v262
      %v264 = vadd.f32 %v258, %v261
      %v265 = vrot.slane %v257, 1
      %v266 = vrot.slane %v258, 1
      %v267 = vsel %vm240, %v265, %v266
      %v268 = vsel %vm240, %v266, %v265
      %v269 = vadd.f32 %v263, %v267
      %v270 = vadd.f32 %v264, %v268
      %v271 = vmul.f32 %v269, 0.11111111
      %v272 = vmul.f32 %v270, 0.11111111
      %v273 = vmul.f32 %v211, %v211
      %v274 = vmul.f32 %v212, %v212
      %275 = vrot.lane.b32.xlu0 %v273, 8
      %v276 = vpop.permute.xlu0 %275
      %277 = vrot.lane.b32.xlu0 %v274, 8
      %v278 = vpop.permute.xlu0 %277
      %v279 = vadd.f32 %v273, %v276
      %v280 = vadd.f32 %v274, %v278
      %281 = vrot.lane.b32.xlu0 %v273, 120
      %v282 = vpop.permute.xlu0 %281
      %283 = vrot.lane.b32.xlu0 %v274, 120
      %v284 = vpop.permute.xlu0 %283
      %v285 = vadd.f32 %v279, %v282
      %v286 = vadd.f32 %v280, %v284
      %v287 = vrot.slane %v285, 7
      %v288 = vrot.slane %v286, 7
      %v289 = vsel %vm233, %v287, %v288
      %v290 = vsel %vm233, %v288, %v287
      %v291 = vadd.f32 %v285, %v290
      %v292 = vadd.f32 %v286, %v289
      %v293 = vrot.slane %v285, 1
      %v294 = vrot.slane %v286, 1
      %v295 = vsel %vm240, %v293, %v294
      %v296 = vsel %vm240, %v294, %v293
      %v297 = vadd.f32 %v291, %v295
      %v298 = vadd.f32 %v292, %v296
      %v299 = vmul.f32 %v297, 0.11111111
      %v300 = vmul.f32 %v298, 0.11111111
      %v301 = vmul.f32 %v245, %v245
      %v302 = vmul.f32 %v246, %v246
      %v303 = vsub.f32 %v299, %v301
      %v304 = vsub.f32 %v300, %v302
      %v305 = vmul.f32 %v213, %v213
      %v306 = vmul.f32 %v214, %v214
      %307 = vrot.lane.b32.xlu0 %v305, 8
      %v308 = vpop.permute.xlu0 %307
      %309 = vrot.lane.b32.xlu0 %v306, 8
      %v310 = vpop.permute.xlu0 %309
      %v311 = vadd.f32 %v305, %v308
      %v312 = vadd.f32 %v306, %v310
      %313 = vrot.lane.b32.xlu0 %v305, 120
      %v314 = vpop.permute.xlu0 %313
      %315 = vrot.lane.b32.xlu0 %v306, 120
      %v316 = vpop.permute.xlu0 %315
      %v317 = vadd.f32 %v311, %v314
      %v318 = vadd.f32 %v312, %v316
      %v319 = vrot.slane %v317, 7
      %v320 = vrot.slane %v318, 7
      %v321 = vsel %vm233, %v319, %v320
      %v322 = vsel %vm233, %v320, %v319
      %v323 = vadd.f32 %v317, %v322
      %v324 = vadd.f32 %v318, %v321
      %v325 = vrot.slane %v317, 1
      %v326 = vrot.slane %v318, 1
      %v327 = vsel %vm240, %v325, %v326
      %v328 = vsel %vm240, %v326, %v325
      %v329 = vadd.f32 %v323, %v327
      %v330 = vadd.f32 %v324, %v328
      %v331 = vmul.f32 %v329, 0.11111111
      %v332 = vmul.f32 %v330, 0.11111111
      %v333 = vmul.f32 %v271, %v271
      %v334 = vmul.f32 %v272, %v272
      %v335 = vsub.f32 %v331, %v333
      %v336 = vsub.f32 %v332, %v334
      %v337 = vmul.f32 %v211, %v213
      %v338 = vmul.f32 %v212, %v214
      %339 = vrot.lane.b32.xlu0 %v337, 8
      %v340 = vpop.permute.xlu0 %339
      %341 = vrot.lane.b32.xlu0 %v338, 8
      %v342 = vpop.permute.xlu0 %341
      %v343 = vadd.f32 %v337, %v340
      %v344 = vadd.f32 %v338, %v342
      %345 = vrot.lane.b32.xlu0 %v337, 120
      %v346 = vpop.permute.xlu0 %345
      %347 = vrot.lane.b32.xlu0 %v338, 120
      %v348 = vpop.permute.xlu0 %347
      %v349 = vadd.f32 %v343, %v346
      %v350 = vadd.f32 %v344, %v348
      %v351 = vrot.slane %v349, 7
      %v352 = vrot.slane %v350, 7
      %v353 = vsel %vm233, %v351, %v352
      %v354 = vsel %vm233, %v352, %v351
      %v355 = vadd.f32 %v349, %v354
      %v356 = vadd.f32 %v350, %v353
      %v357 = vrot.slane %v349, 1
      %v358 = vrot.slane %v350, 1
      %v359 = vsel %vm240, %v357, %v358
      %v360 = vsel %vm240, %v358, %v357
      %v361 = vadd.f32 %v355, %v359
      %v362 = vadd.f32 %v356, %v360
      %v363 = vmul.f32 %v361, 0.11111111
      %v364 = vmul.f32 %v362, 0.11111111
      %v365 = vmul.f32 %v245, %v271
      %v366 = vmul.f32 %v246, %v272
      %v367 = vsub.f32 %v363, %v365
      %v368 = vsub.f32 %v364, %v366
      %369 = vrot.lane.b32.xlu0 %v215, 8
      %v370 = vpop.permute.xlu0 %369
      %371 = vrot.lane.b32.xlu0 %v216, 8
      %v372 = vpop.permute.xlu0 %371
      %v373 = vadd.f32 %v215, %v370
      %v374 = vadd.f32 %v216, %v372
      %375 = vrot.lane.b32.xlu0 %v215, 120
      %v376 = vpop.permute.xlu0 %375
      %377 = vrot.lane.b32.xlu0 %v216, 120
      %v378 = vpop.permute.xlu0 %377
      %v379 = vadd.f32 %v373, %v376
      %v380 = vadd.f32 %v374, %v378
      %v381 = vrot.slane %v379, 7
      %v382 = vrot.slane %v380, 7
      %v383 = vsel %vm233, %v381, %v382
      %v384 = vsel %vm233, %v382, %v381
      %v385 = vadd.f32 %v379, %v384
      %v386 = vadd.f32 %v380, %v383
      %v387 = vrot.slane %v379, 1
      %v388 = vrot.slane %v380, 1
      %v389 = vsel %vm240, %v387, %v388
      %v390 = vsel %vm240, %v388, %v387
      %v391 = vadd.f32 %v385, %v389
      %v392 = vadd.f32 %v386, %v390
      %v393 = vmul.f32 %v391, 0.11111111
      %v394 = vmul.f32 %v392, 0.11111111
      %v395 = vmul.f32 %v245, 2.0
      %v396 = vmul.f32 %v246, 2.0
      %v397 = vmul.f32 %v395, %v271
      %v398 = vmul.f32 %v396, %v272
      %v399 = vadd.f32 %v397, 0.0001
      %v400 = vadd.f32 %v398, 0.0001
      %v401 = vmul.f32 %v367, 2.0
      %v402 = vmul.f32 %v368, 2.0
      %v403 = vadd.f32 %v401, 0.0009
      %v404 = vadd.f32 %v402, 0.0009
      %v405 = vmul.f32 %v399, %v403
      %v406 = vmul.f32 %v400, %v404
      %v407 = vadd.f32 %v301, %v333
      %v408 = vadd.f32 %v302, %v334
      %v409 = vadd.f32 %v407, 0.0001
      %v410 = vadd.f32 %v408, 0.0001
      %v411 = vadd.f32 %v303, %v335
      %v412 = vadd.f32 %v304, %v336
      %v413 = vadd.f32 %v411, 0.0009
      %v414 = vadd.f32 %v412, 0.0009
      %v415 = vmul.f32 %v409, %v413
      %v416 = vmul.f32 %v410, %v414
      %v417 = vrcp.pop %v415
      %v418 = vrcp.pop %v416
      %v419 = vmul.f32 %v415, %v417
      %v420 = vmul.f32 %v416, %v418
      %v421 = vsub.f32 2.0, %v419
      %v422 = vsub.f32 2.0, %v420
      %v423 = vmul.f32 %v417, %v421
      %v424 = vmul.f32 %v418, %v422
      %v425 = vmul.f32 %v405, %v423
      %v426 = vmul.f32 %v406, %v424
      %v427 = vsub.f32 1.0, %v425
      %v428 = vsub.f32 1.0, %v426
      %v429 = vmul.f32 %v427, 0.5
      %v430 = vmul.f32 %v428, 0.5
      %v431 = vmax.f32 %v429, 0.0
      %v432 = vmax.f32 %v430, 0.0
      %v433 = vmin.f32 %v431, 1.0
      %v434 = vmin.f32 %v432, 1.0
      %v435 = vmul.f32 %v393, %v433
      %v436 = vmul.f32 %v394, %v434
      %439 = vrot.lane.b32.xlu0 %v435, 120
      %v440 = vpop.permute.xlu0 %439
      %441 = vrot.lane.b32.xlu0 %v436, 120
      %v442 = vpop.permute.xlu0 %441
      %vm445 = vcmask 916481
      %446 = vst.msk [vmem:[%s210 - $0x1] sm:$0xfe] %vm445, %v440
      %vm447 = vcmask 915456
      %448 = vst.msk [vmem:[%s210 + $0x7] sm:$0x7f] %vm447, %v442
      %p449 = scmp.lt.s32.totalorder %s14, 1
      %s450 = scalar_select %p449, %s14, 1
      %s451 = smul.addr %s450, 2
      %s452 = smul.addr %s451, 8
      %s453 = scalar_lea.vmem %s3, %s452
      // Predicated region
      $region33: #{ssim_forward.1} parent=31 // pred_check
        %p454 = pneg %p110
      $region34: #{ssim_forward.1} parent=31 // pred_check_branch
        %456 = sbr.rel (%p454) target = $region36
      $region35: #{ssim_forward.1} parent=31 // pred_region
        _
      $region36: #{ssim_forward.1} parent=31 // pred_fallthru
        _
    $region32: #{ssim_forward.1} parent=5 // pred_fallthru
      _
    %p457 = scmp.le.s32.totalorder 2, %s9
    // Predicated region
    $region37: #{ssim_forward.1} parent=5 // pred_check
      %p458 = pneg %p457
    $region38: #{ssim_forward.1} parent=5 // pred_check_branch
      %460 = sbr.rel (%p458) target = $region40
    $region39: #{ssim_forward.1} parent=5 // pred_region
      %s461 = ssub.s32 %s9, 2
      // Predicated region
      $region41: #{ssim_forward.1} parent=39 // pred_check
        %p462 = pneg %p116
      $region42: #{ssim_forward.1} parent=39 // pred_check_branch
        %464 = sbr.rel (%p462) target = $region44
      $region43: #{ssim_forward.1} parent=39 // pred_region
        %p465 = scmp.lt.s32.totalorder %s15, 1
        %s466 = scalar_select %p465, %s15, 1
        %s467 = smul.addr %s466, 2
        %s468 = smul.addr %s467, 8
        %s469 = scalar_lea.vmem %s3, %s468
      $region44: #{ssim_forward.1} parent=39 // pred_fallthru
        _
    $region40: #{ssim_forward.1} parent=5 // pred_fallthru
      _
  $region6: #{ssim_forward.1} parent=0 // loop_footer
    %s13 = sadd.s32 1, %s9
  $region7: #{ssim_forward.1} parent=0 // loop_footer_branch
    %8 = sbr.rel target = $region3
  $region8: #{ssim_forward.1} parent=0 // loop_exit
    _

</llo_original>
